<compile_context>
chip_gen: v7x
topology: tpu7x:2x2x1
jax: 0.10.0
libtpu: 0.0.40
codegen_flags: <defaults>
</compile_context>

<pallas_src>
import math

import jax
import jax.numpy as jnp
from jax.experimental import pallas as pl
from jax.experimental.pallas import tpu as pltpu

SMOOTH = 1.0
GAMMA = 2.0          # kernel hard-codes gamma == 2 (exact squares)
EPS = 1e-3
LANES = 128


def _round_up(a, m):
    return ((a + m - 1) // m) * m


def _is_multi_tensorcore():
    # v7x-class chips have 2 TensorCores per chip; v5e/v6e have 1.
    try:
        kind = jax.devices()[0].device_kind.lower()
    except Exception:
        return False
    return ("v7" in kind) or ("7x" in kind)


def _make_kernel(*, B, R, R_blk, sub_rows, n_inner, needs_mask, assume_binary):
    n_sub = R_blk // sub_rows

    def kernel(x_ref, t_ref, inter_ref, s2_ref, focal_ref,
               inter_sc, s2_sc, focal_sc):
        i = pl.program_id(0)          # outer ("parallel") axis
        j = pl.program_id(1)          # inner sequential reduction axis

        @pl.when(j == 0)
        def _():
            inter_sc[...] = jnp.zeros_like(inter_sc)
            s2_sc[...] = jnp.zeros_like(s2_sc)
            focal_sc[...] = jnp.zeros_like(focal_sc)

        if needs_mask:
            row_start = (i * n_inner + j) * R_blk   # global row of this block
            rows_left = R - row_start               # valid rows in this block

        # Static sub-slab loop: bounds VMEM temporaries to ~sub_rows rows.
        for s in range(n_sub):
            off = s * sub_rows
            x = x_ref[:, pl.ds(off, sub_rows), :].astype(jnp.float32)
            t = t_ref[:, pl.ds(off, sub_rows), :].astype(jnp.float32)

            if needs_mask:
                rows = off + jax.lax.broadcasted_iota(
                    jnp.int32, (B, sub_rows, LANES), 1)
                valid = rows < rows_left
                x = jnp.where(valid, x, 0.0)
                t = jnp.where(valid, t, 0.0)

            # ---- Dice partials (per sample, per lane).
            inter_sc[...] += jnp.sum(x * t, axis=1)
            xt = x + t
            s2_sc[...] += jnp.sum(xt * xt, axis=1)   # union = s2 - 2*inter (wrapper)

            # ---- Focal partial, gamma == 2, UN-negated (wrapper negates).
            xc = jnp.clip(x, EPS, 1.0 - EPS)
            one_m = 1.0 - xc
            if assume_binary:
                # exact only for t in {0, 1}: single log per element
                tb = t != 0.0
                p_t = jnp.where(tb, xc, one_m)
                q_t = jnp.where(tb, one_m, xc)
                fl = (q_t * q_t) * jnp.log(p_t)
            else:
                fl = (t * (one_m * one_m) * jnp.log(xc)
                      + (1.0 - t) * (xc * xc) * jnp.log(one_m))
            if needs_mask:
                fl = jnp.where(valid, fl, 0.0)
            focal_sc[...] += jnp.sum(fl, axis=1)

        # ---- End of this core's sweep: lane-dense copy-out of the partials.
        @pl.when(j == pl.num_programs(1) - 1)
        def _():
            inter_ref[...] = inter_sc[...][None]
            s2_ref[...] = s2_sc[...][None]
            focal_ref[...] = focal_sc[...][None]

    return kernel


def dice_and_focal_loss(inp, tgt, *,
                        target_block_bytes=4 * 1024 * 1024,
                        sub_block_bytes=512 * 1024,
                        assume_binary_targets=False):
    """inp, tgt: same-shape (B, ...) tensors, predictions in (0, 1).

    Returns scalar f32: DiceLoss(inp, tgt) + FocalLoss(inp, tgt) (gamma=2).
    Set assume_binary_targets=True only when tgt is exactly {0, 1}.
    """
    # TODO(synk): gamma is hard-coded to 2 (exact squares); other gammas would
    # need jnp.power in the kernel.
    assert inp.shape == tgt.shape
    B = inp.shape[0]
    N = 1
    for d in inp.shape[1:]:
        N *= d

    x2 = inp.reshape(B, N)
    t2 = tgt.reshape(B, N)

    # --- lane layout: (B, R, 128).  Zero-copy reshape when N % 128 == 0. ----
    R = pl.cdiv(N, LANES)
    pad_lanes = R * LANES - N
    if pad_lanes:
        # Rare path: only the lane remainder is padded; its focal contribution
        # (each (0,0) element adds exactly eps^2*log(1-eps) to the un-negated
        # sum) is removed analytically below.
        x2 = jnp.pad(x2, ((0, 0), (0, pad_lanes)))
        t2 = jnp.pad(t2, ((0, 0), (0, pad_lanes)))
    x3 = x2.reshape(B, R, LANES)
    t3 = t2.reshape(B, R, LANES)

    itemsize = max(jnp.dtype(x3.dtype).itemsize, jnp.dtype(t3.dtype).itemsize)
    bytes_per_row = B * LANES * itemsize

    # Sub-slab rows (multiple of 8): bounds in-kernel f32 temporaries.
    sub_rows = max(8, (sub_block_bytes // bytes_per_row) // 8 * 8)
    sub_rows = min(sub_rows, _round_up(R, 8))

    # Block rows: a multiple of sub_rows, ~target_block_bytes per input.
    rows_target = max(sub_rows,
                      (target_block_bytes // bytes_per_row) // sub_rows * sub_rows)
    R_blk = min(_round_up(R, sub_rows), rows_target)

    n_row_blocks = pl.cdiv(R, R_blk)
    needs_mask = (R % R_blk) != 0

    # 2-way outer split only on multi-TensorCore chips and only when the
    # row-block count is even (no fully out-of-bounds block, no overshoot).
    n_outer = 2 if (_is_multi_tensorcore() and n_row_blocks >= 2
                    and n_row_blocks % 2 == 0) else 1
    n_inner = n_row_blocks // n_outer
    # TODO(synk): verify on v7x xprof that the "parallel" outer axis actually
    # shards across both TensorCores; if not, switch to pltpu.CORE_PARALLEL.

    kernel = _make_kernel(B=B, R=R, R_blk=R_blk, sub_rows=sub_rows,
                          n_inner=n_inner, needs_mask=needs_mask,
                          assume_binary=assume_binary_targets)

    def row_map(i, j):
        return (0, i * n_inner + j, 0)

    partial_shape = jax.ShapeDtypeStruct((n_outer, B, LANES), jnp.float32)
    partial_spec = pl.BlockSpec((1, B, LANES), lambda i, j: (i, 0, 0))

    inter_p, s2_p, focal_p = pl.pallas_call(
        kernel,
        out_shape=(partial_shape, partial_shape, partial_shape),
        grid_spec=pltpu.PrefetchScalarGridSpec(
            num_scalar_prefetch=0,
            grid=(n_outer, n_inner),
            in_specs=[
                pl.BlockSpec((B, R_blk, LANES), row_map),
                pl.BlockSpec((B, R_blk, LANES), row_map),
            ],
            out_specs=[partial_spec, partial_spec, partial_spec],
            scratch_shapes=[
                pltpu.VMEM((B, LANES), jnp.float32),   # intersect, per sample
                pltpu.VMEM((B, LANES), jnp.float32),   # sum((x+t)^2), per sample
                pltpu.VMEM((B, LANES), jnp.float32),   # focal running sum
            ],
        ),
        compiler_params=pltpu.CompilerParams(
            dimension_semantics=("parallel", "arbitrary"),
            vmem_limit_bytes=32 * 1024 * 1024,
        ),
    )(x3, t3)

    # --- final combine (a few FLOPs) in plain JAX ---------------------------
    inter = jnp.sum(inter_p, axis=(0, 2))          # (B,)
    s2 = jnp.sum(s2_p, axis=(0, 2))                # (B,)
    union = s2 - 2.0 * inter
    dice = jnp.mean(1.0 - (2.0 * inter + SMOOTH) / (union + SMOOTH))

    focal_sum = jnp.sum(focal_p)                   # un-negated sum
    if pad_lanes:
        focal_sum = focal_sum - jnp.float32(
            B * pad_lanes * (EPS * EPS) * math.log(1.0 - EPS))
    focal = -focal_sum / jnp.float32(B * N)

    return (dice + focal).astype(jnp.float32)


def _reference(inp, tgt):
    # pure-JAX reference mirroring the PyTorch module
    axes = tuple(range(1, inp.ndim))
    intersect = jnp.sum(inp * tgt, axis=axes)
    union = jnp.sum(inp ** 2, axis=axes) + jnp.sum(tgt ** 2, axis=axes)
    dice = jnp.mean(1.0 - (2.0 * intersect + SMOOTH) / (union + SMOOTH))
    xc = jnp.clip(inp, EPS, 1.0 - EPS)
    focal = jnp.mean(-(tgt * (1.0 - xc) ** GAMMA * jnp.log(xc)
                       + (1.0 - tgt) * xc ** GAMMA * jnp.log(1.0 - xc)))
    return dice + focal


if __name__ == "__main__":
    key = jax.random.PRNGKey(0)
    k1, k2 = jax.random.split(key)
    B, C, H, W = 2, 4, 16, 16
    # predictions in (0, 1), binary targets
    x = jax.random.uniform(k1, (B, C, H, W), dtype=jnp.float32)
    t = (jax.random.uniform(k2, (B, C, H, W), dtype=jnp.float32) > 0.5).astype(jnp.float32)

    loss = jax.block_until_ready(dice_and_focal_loss(x, t))
    ref = jax.block_until_ready(_reference(x, t))
    assert jnp.allclose(loss, ref, rtol=1e-4, atol=1e-4), (loss, ref)

    # flag-gated single-log fast path (exact for {0,1} targets)
    loss_bin = jax.block_until_ready(
        dice_and_focal_loss(x, t, assume_binary_targets=True))
    assert jnp.allclose(loss_bin, ref, rtol=1e-4, atol=1e-4), (loss_bin, ref)

    print("KERNEL_OK")
</pallas_src>

<mosaic_0001>
module attributes {stable_mosaic.version = 11 : i64} {
  func.func @kernel(%arg0: i32, %arg1: i32, %arg2: memref<2x8x128xf32, #tpu.memory_space<vmem>>, %arg3: memref<2x8x128xf32, #tpu.memory_space<vmem>>, %arg4: memref<1x2x128xf32, #tpu.memory_space<vmem>>, %arg5: memref<1x2x128xf32, #tpu.memory_space<vmem>>, %arg6: memref<1x2x128xf32, #tpu.memory_space<vmem>>, %arg7: memref<2x128xf32, #tpu.memory_space<vmem>>, %arg8: memref<2x128xf32, #tpu.memory_space<vmem>>, %arg9: memref<2x128xf32, #tpu.memory_space<vmem>>) attributes {dimension_semantics = [#tpu.dimension_semantics<parallel>, #tpu.dimension_semantics<arbitrary>], iteration_bounds = array<i64: 1, 1>, scalar_prefetch = 0 : i64, scratch_operands = 3 : i64, tpu.core_type = #tpu.core_type<tc>, window_params = [{transform_indices = @transform_0, window_bounds = array<i64: 2, 8, 128>}, {transform_indices = @transform_1, window_bounds = array<i64: 2, 8, 128>}, {transform_indices = @transform_2, window_bounds = array<i64: 1, 2, 128>}, {transform_indices = @transform_3, window_bounds = array<i64: 1, 2, 128>}, {transform_indices = @transform_4, window_bounds = array<i64: 1, 2, 128>}]} {
    %c0_i32 = arith.constant 0 : i32
    %0 = arith.cmpi eq, %arg1, %c0_i32 : i32
    %1 = arith.extui %0 : i1 to i32
    %c0_i32_0 = arith.constant 0 : i32
    %2 = arith.cmpi ne, %1, %c0_i32_0 : i32
    scf.if %2 {
      %cst_26 = arith.constant 0.000000e+00 : f32
      %40 = vector.broadcast %cst_26 : f32 to vector<2x128xf32>
      %c0_27 = arith.constant 0 : index
      %c0_28 = arith.constant 0 : index
      %41 = vector.load %arg7[%c0_27, %c0_28] : memref<2x128xf32, #tpu.memory_space<vmem>>, vector<2x128xf32>
      tpu.vector_store %arg7[%c0_27, %c0_28], %40 {strides = array<i32>} : memref<2x128xf32, #tpu.memory_space<vmem>>, vector<2x128xf32>,
      %cst_29 = arith.constant 0.000000e+00 : f32
      %42 = vector.broadcast %cst_29 : f32 to vector<2x128xf32>
      %c0_30 = arith.constant 0 : index
      %c0_31 = arith.constant 0 : index
      %43 = vector.load %arg8[%c0_30, %c0_31] : memref<2x128xf32, #tpu.memory_space<vmem>>, vector<2x128xf32>
      tpu.vector_store %arg8[%c0_30, %c0_31], %42 {strides = array<i32>} : memref<2x128xf32, #tpu.memory_space<vmem>>, vector<2x128xf32>,
      %cst_32 = arith.constant 0.000000e+00 : f32
      %44 = vector.broadcast %cst_32 : f32 to vector<2x128xf32>
      %c0_33 = arith.constant 0 : index
      %c0_34 = arith.constant 0 : index
      %45 = vector.load %arg9[%c0_33, %c0_34] : memref<2x128xf32, #tpu.memory_space<vmem>>, vector<2x128xf32>
      tpu.vector_store %arg9[%c0_33, %c0_34], %44 {strides = array<i32>} : memref<2x128xf32, #tpu.memory_space<vmem>>, vector<2x128xf32>,
    } else {
    }
    %c0 = arith.constant 0 : index
    %c0_1 = arith.constant 0 : index
    %c0_2 = arith.constant 0 : index
    %3 = vector.load %arg2[%c0, %c0_1, %c0_2] : memref<2x8x128xf32, #tpu.memory_space<vmem>>, vector<2x8x128xf32>
    %c0_3 = arith.constant 0 : index
    %c0_4 = arith.constant 0 : index
    %c0_5 = arith.constant 0 : index
    %4 = vector.load %arg3[%c0_3, %c0_4, %c0_5] : memref<2x8x128xf32, #tpu.memory_space<vmem>>, vector<2x8x128xf32>
    %c0_6 = arith.constant 0 : index
    %c0_7 = arith.constant 0 : index
    %5 = vector.load %arg7[%c0_6, %c0_7] : memref<2x128xf32, #tpu.memory_space<vmem>>, vector<2x128xf32>
    %6 = arith.mulf %3, %4 : vector<2x8x128xf32>
    %cst = arith.constant dense<0.000000e+00> : vector<2x128xf32>
    %7 = vector.multi_reduction <add>, %6, %cst [1] : vector<2x8x128xf32> to vector<2x128xf32>
    %8 = arith.addf %5, %7 : vector<2x128xf32>
    %c0_8 = arith.constant 0 : index
    %c0_9 = arith.constant 0 : index
    %9 = vector.load %arg7[%c0_8, %c0_9] : memref<2x128xf32, #tpu.memory_space<vmem>>, vector<2x128xf32>
    tpu.vector_store %arg7[%c0_8, %c0_9], %8 {strides = array<i32>} : memref<2x128xf32, #tpu.memory_space<vmem>>, vector<2x128xf32>,
    %10 = arith.addf %3, %4 : vector<2x8x128xf32>
    %c0_10 = arith.constant 0 : index
    %c0_11 = arith.constant 0 : index
    %11 = vector.load %arg8[%c0_10, %c0_11] : memref<2x128xf32, #tpu.memory_space<vmem>>, vector<2x128xf32>
    %12 = arith.mulf %10, %10 : vector<2x8x128xf32>
    %cst_12 = arith.constant dense<0.000000e+00> : vector<2x128xf32>
    %13 = vector.multi_reduction <add>, %12, %cst_12 [1] : vector<2x8x128xf32> to vector<2x128xf32>
    %14 = arith.addf %11, %13 : vector<2x128xf32>
    %c0_13 = arith.constant 0 : index
    %c0_14 = arith.constant 0 : index
    %15 = vector.load %arg8[%c0_13, %c0_14] : memref<2x128xf32, #tpu.memory_space<vmem>>, vector<2x128xf32>
    tpu.vector_store %arg8[%c0_13, %c0_14], %14 {strides = array<i32>} : memref<2x128xf32, #tpu.memory_space<vmem>>, vector<2x128xf32>,
    %cst_15 = arith.constant 1.000000e-03 : f32
    %cst_16 = arith.constant 9.990000e-01 : f32
    %16 = vector.broadcast %cst_15 : f32 to vector<2x8x128xf32>
    %17 = arith.maximumf %16, %3 : vector<2x8x128xf32>
    %18 = vector.broadcast %cst_16 : f32 to vector<2x8x128xf32>
    %19 = arith.minimumf %18, %17 : vector<2x8x128xf32>
    %cst_17 = arith.constant 1.000000e+00 : f32
    %20 = vector.broadcast %cst_17 : f32 to vector<2x8x128xf32>
    %21 = arith.subf %20, %19 : vector<2x8x128xf32>
    %22 = arith.mulf %21, %21 : vector<2x8x128xf32>
    %23 = arith.mulf %4, %22 : vector<2x8x128xf32>
    %24 = math.log %19 : vector<2x8x128xf32>
    %25 = arith.mulf %23, %24 : vector<2x8x128xf32>
    %cst_18 = arith.constant 1.000000e+00 : f32
    %26 = vector.broadcast %cst_18 : f32 to vector<2x8x128xf32>
    %27 = arith.subf %26, %4 : vector<2x8x128xf32>
    %28 = arith.mulf %19, %19 : vector<2x8x128xf32>
    %29 = arith.mulf %27, %28 : vector<2x8x128xf32>
    %30 = math.log %21 : vector<2x8x128xf32>
    %31 = arith.mulf %29, %30 : vector<2x8x128xf32>
    %32 = arith.addf %25, %31 : vector<2x8x128xf32>
    %c0_19 = arith.constant 0 : index
    %c0_20 = arith.constant 0 : index
    %33 = vector.load %arg9[%c0_19, %c0_20] : memref<2x128xf32, #tpu.memory_space<vmem>>, vector<2x128xf32>
    %cst_21 = arith.constant dense<0.000000e+00> : vector<2x128xf32>
    %34 = vector.multi_reduction <add>, %32, %cst_21 [1] : vector<2x8x128xf32> to vector<2x128xf32>
    %35 = arith.addf %33, %34 : vector<2x128xf32>
    %c0_22 = arith.constant 0 : index
    %c0_23 = arith.constant 0 : index
    %36 = vector.load %arg9[%c0_22, %c0_23] : memref<2x128xf32, #tpu.memory_space<vmem>>, vector<2x128xf32>
    tpu.vector_store %arg9[%c0_22, %c0_23], %35 {strides = array<i32>} : memref<2x128xf32, #tpu.memory_space<vmem>>, vector<2x128xf32>,
    %c0_i32_24 = arith.constant 0 : i32
    %37 = arith.cmpi eq, %arg1, %c0_i32_24 : i32
    %38 = arith.extui %37 : i1 to i32
    %c0_i32_25 = arith.constant 0 : i32
    %39 = arith.cmpi ne, %38, %c0_i32_25 : i32
    scf.if %39 {
      %c0_26 = arith.constant 0 : index
      %c0_27 = arith.constant 0 : index
      %40 = vector.load %arg7[%c0_26, %c0_27] : memref<2x128xf32, #tpu.memory_space<vmem>>, vector<2x128xf32>
      %41 = vector.shape_cast %40 : vector<2x128xf32> to vector<1x2x128xf32>
      %c0_28 = arith.constant 0 : index
      %c0_29 = arith.constant 0 : index
      %c0_30 = arith.constant 0 : index
      %42 = vector.load %arg4[%c0_28, %c0_29, %c0_30] : memref<1x2x128xf32, #tpu.memory_space<vmem>>, vector<1x2x128xf32>
      tpu.vector_store %arg4[%c0_28, %c0_29, %c0_30], %41 {strides = array<i32>} : memref<1x2x128xf32, #tpu.memory_space<vmem>>, vector<1x2x128xf32>,
      %c0_31 = arith.constant 0 : index
      %c0_32 = arith.constant 0 : index
      %43 = vector.load %arg8[%c0_31, %c0_32] : memref<2x128xf32, #tpu.memory_space<vmem>>, vector<2x128xf32>
      %44 = vector.shape_cast %43 : vector<2x128xf32> to vector<1x2x128xf32>
      %c0_33 = arith.constant 0 : index
      %c0_34 = arith.constant 0 : index
      %c0_35 = arith.constant 0 : index
      %45 = vector.load %arg5[%c0_33, %c0_34, %c0_35] : memref<1x2x128xf32, #tpu.memory_space<vmem>>, vector<1x2x128xf32>
      tpu.vector_store %arg5[%c0_33, %c0_34, %c0_35], %44 {strides = array<i32>} : memref<1x2x128xf32, #tpu.memory_space<vmem>>, vector<1x2x128xf32>,
      %c0_36 = arith.constant 0 : index
      %c0_37 = arith.constant 0 : index
      %46 = vector.load %arg9[%c0_36, %c0_37] : memref<2x128xf32, #tpu.memory_space<vmem>>, vector<2x128xf32>
      %47 = vector.shape_cast %46 : vector<2x128xf32> to vector<1x2x128xf32>
      %c0_38 = arith.constant 0 : index
      %c0_39 = arith.constant 0 : index
      %c0_40 = arith.constant 0 : index
      %48 = vector.load %arg6[%c0_38, %c0_39, %c0_40] : memref<1x2x128xf32, #tpu.memory_space<vmem>>, vector<1x2x128xf32>
      tpu.vector_store %arg6[%c0_38, %c0_39, %c0_40], %47 {strides = array<i32>} : memref<1x2x128xf32, #tpu.memory_space<vmem>>, vector<1x2x128xf32>,
    } else {
    }
    return
  }
  func.func @transform_0(%arg0: i32, %arg1: i32) -> (i32, i32, i32) {
    %c1_i32 = arith.constant 1 : i32
    %0 = arith.muli %arg0, %c1_i32 : i32
    %1 = arith.addi %0, %arg1 : i32
    %c0_i32 = arith.constant 0 : i32
    %c0_i32_0 = arith.constant 0 : i32
    %c0_i32_1 = arith.constant 0 : i32
    return %c0_i32, %1, %c0_i32_0 : i32, i32, i32
  }
  func.func @transform_1(%arg0: i32, %arg1: i32) -> (i32, i32, i32) {
    %c1_i32 = arith.constant 1 : i32
    %0 = arith.muli %arg0, %c1_i32 : i32
    %1 = arith.addi %0, %arg1 : i32
    %c0_i32 = arith.constant 0 : i32
    %c0_i32_0 = arith.constant 0 : i32
    %c0_i32_1 = arith.constant 0 : i32
    return %c0_i32, %1, %c0_i32_0 : i32, i32, i32
  }
  func.func @transform_2(%arg0: i32, %arg1: i32) -> (i32, i32, i32) {
    %c0_i32 = arith.constant 0 : i32
    %c0_i32_0 = arith.constant 0 : i32
    %c0_i32_1 = arith.constant 0 : i32
    return %arg0, %c0_i32, %c0_i32_0 : i32, i32, i32
  }
  func.func @transform_3(%arg0: i32, %arg1: i32) -> (i32, i32, i32) {
    %c0_i32 = arith.constant 0 : i32
    %c0_i32_0 = arith.constant 0 : i32
    %c0_i32_1 = arith.constant 0 : i32
    return %arg0, %c0_i32, %c0_i32_0 : i32, i32, i32
  }
  func.func @transform_4(%arg0: i32, %arg1: i32) -> (i32, i32, i32) {
    %c0_i32 = arith.constant 0 : i32
    %c0_i32_0 = arith.constant 0 : i32
    %c0_i32_1 = arith.constant 0 : i32
    return %arg0, %c0_i32, %c0_i32_0 : i32, i32, i32
  }
}

</mosaic_0001>

<llo_original>
// kernel: tpu_custom_call.1
$region0: #{tpu_custom_call.1}
  #allocation0 [shape = 'u32[]', space=smem, size = 0x4, offset = 0x4, fixed_abs, tag = 'smem constant byte address 0x4 - core index']
  #allocation1 [shape = 'u32[144,128]{1,0:T(1,128)}', space=vmem, size = 0x12000, scoped, tag = 'internal scratch']
  #allocation2 [shape = 'f32[2,128]{1,0:T(2,128)}', space=vmem, size = 0x400, scoped, tag = 'scratch operand']
  #allocation3 [shape = 'f32[2,128]{1,0:T(2,128)}', space=vmem, size = 0x400, scoped, tag = 'scratch operand']
  #allocation4 [shape = 'f32[2,128]{1,0:T(2,128)}', space=vmem, size = 0x400, scoped, tag = 'scratch operand']
  %s0 = inlined_call_operand.hbm [shape: f32[2,8,128], index: 0, kind: input, shape index: {}]
  %s1 = inlined_call_operand.hbm [shape: f32[2,8,128], index: 1, kind: input, shape index: {}]
  %s2 = inlined_call_operand.hbm [shape: f32[1,2,128], index: 2, kind: output, shape index: {0}]
  %s3 = inlined_call_operand.hbm [shape: f32[1,2,128], index: 3, kind: output, shape index: {1}]
  %s4 = inlined_call_operand.hbm [shape: f32[1,2,128], index: 4, kind: output, shape index: {2}]
  %5 = xla_tuple %s2, %s3, %s4
  %s6 = sld [smem:[#allocation0]]
  $region50: #{tpu_custom_call.1} parent=0
    _
  %s8 = ssub.s32 1, %s6
  %s9 = scalar_select 0, %s8, %s6
  $region1: #{tpu_custom_call.1} parent=0
    #allocation5 [shape = 'u8[8192]{0}', space=vmem, size = 0x2000, scoped, tag = 'input window, operand 0, single buffered']
    #allocation6 [shape = 's32[1]{0}', space=sflag, size = 0x4, scoped, tag = 'scoped memory for tpu_custom_call.1']
    #allocation7 [shape = 's32[1]{0}', space=sflag, size = 0x4, scoped, tag = 'scoped memory for tpu_custom_call.1']
    #allocation8 [shape = 'u8[8192]{0}', space=vmem, size = 0x2000, scoped, tag = 'input window, operand 1, single buffered']
    #allocation9 [shape = 's32[1]{0}', space=sflag, size = 0x4, scoped, tag = 'scoped memory for tpu_custom_call.1']
    #allocation10 [shape = 'u8[1024]{0}', space=vmem, size = 0x400, scoped, tag = 'output window, operand 0, single buffered']
    #allocation11 [shape = 'u8[1024]{0}', space=vmem, size = 0x400, scoped, tag = 'output window, operand 1, single buffered']
    #allocation12 [shape = 's32[1]{0}', space=sflag, size = 0x4, scoped, tag = 'scoped memory for tpu_custom_call.1']
    #allocation13 [shape = 'u8[1024]{0}', space=vmem, size = 0x400, scoped, tag = 'output window, operand 2, single buffered']
    %10 = vsyncpa [#allocation6], 0
    %11 = vsyncpa [#allocation9], 0
    %12 = vsyncpa [#allocation7], 0
    %13 = vsyncpa [#allocation12], 0
    // Predicated region
    $region2: #{tpu_custom_call.1} parent=1 // pred_check
      _
    $region3: #{tpu_custom_call.1} parent=1 // pred_check_branch
      %15 = sbr.rel (0) target = $region5
    $region4: #{tpu_custom_call.1} parent=1 // pred_region
      %s16 = sadd.s32 0, 0
      %s18 = ssub.s32 256, 256
      %19 = vsyncadd [#allocation6], %s18
      %s20 = smul.addr %s16, 128
      %s21 = scalar_lea.hbm %s0, %s20
      %s22 = sshll.u32 [#allocation5], 4
      %s23 = int_to_ptr.vmem [resolvable:$true] %s22
      %28 = dma.hbm_to_vmem [thread:$0]  %s21, 256, %s23, [#allocation6], 128, 128, 8
    $region5: #{tpu_custom_call.1} parent=1 // pred_fallthru
      _
    // Predicated region
    $region6: #{tpu_custom_call.1} parent=1 // pred_check
      _
    $region7: #{tpu_custom_call.1} parent=1 // pred_check_branch
      %30 = sbr.rel (0) target = $region9
    $region8: #{tpu_custom_call.1} parent=1 // pred_region
      %s31 = sadd.s32 0, 0
      %s33 = ssub.s32 256, 256
      %34 = vsyncadd [#allocation9], %s33
      %s35 = smul.addr %s31, 128
      %s36 = scalar_lea.hbm %s1, %s35
      %s37 = sshll.u32 [#allocation8], 4
      %s38 = int_to_ptr.vmem [resolvable:$true] %s37
      %43 = dma.hbm_to_vmem [thread:$0]  %s36, 256, %s38, [#allocation9], 128, 128, 8
    $region9: #{tpu_custom_call.1} parent=1 // pred_fallthru
      _
    // Predicated region
    $region10: #{tpu_custom_call.1} parent=1 // pred_check
      _
    $region11: #{tpu_custom_call.1} parent=1 // pred_check_branch
      %45 = sbr.rel (0) target = $region13
    $region12: #{tpu_custom_call.1} parent=1 // pred_region
      %46 = dma.done [#allocation6], 256
    $region13: #{tpu_custom_call.1} parent=1 // pred_fallthru
      _
    // Predicated region
    $region14: #{tpu_custom_call.1} parent=1 // pred_check
      _
    $region15: #{tpu_custom_call.1} parent=1 // pred_check_branch
      %48 = sbr.rel (0) target = $region17
    $region16: #{tpu_custom_call.1} parent=1 // pred_region
      %49 = dma.done [#allocation9], 256
    $region17: #{tpu_custom_call.1} parent=1 // pred_fallthru
      _
    %s50 = sadd.s32 0, 0
    %s51 = sadd.s32 0, 0
    %p52 = scmp.eq.s32.totalorder 0, 0
    // Predicated region
    $region18: #{tpu_custom_call.1} parent=1 // pred_check
      %p53 = pneg %p52
    $region19: #{tpu_custom_call.1} parent=1 // pred_check_branch
      %55 = sbr.rel (%p53) target = $region21
    $region20: #{tpu_custom_call.1} parent=1 // pred_region
      %56 = vst [vmem:[#allocation2] sm:$0x3] 0.0
      %57 = vst [vmem:[#allocation3] sm:$0x3] 0.0
      %58 = vst [vmem:[#allocation4] sm:$0x3] 0.0
    $region21: #{tpu_custom_call.1} parent=1 // pred_fallthru
      _
    %v59 = vld [vmem:[#allocation5] sm:$0xff]
    %v60 = vld [vmem:[#allocation5 + $0x8] sm:$0xff]
    %v61 = vld [vmem:[#allocation8] sm:$0xff]
    %v62 = vld [vmem:[#allocation8 + $0x8] sm:$0xff]
    %v63 = vld [vmem:[#allocation2] sm:$0x3]
    %v64 = vmul.f32 %v59, %v61
    %v65 = vmul.f32 %v60, %v62
    %v66 = vrot.slane %v64, 4
    %v67 = vadd.f32 %v64, %v66
    %v68 = vrot.slane %v67, 2
    %v69 = vadd.f32 %v67, %v68
    %v70 = vrot.slane %v69, 1
    %v71 = vadd.f32 %v69, %v70
    %v72 = vrot.slane %v65, 4
    %v73 = vadd.f32 %v65, %v72
    %v74 = vrot.slane %v73, 2
    %v75 = vadd.f32 %v73, %v74
    %v76 = vrot.slane %v75, 1
    %v77 = vadd.f32 %v75, %v76
    %vm80 = vcmask 1041409
    %v81 = vsel %vm80, %v77, %v71
    %v83 = vadd.f32 %v63, %v81
    %84 = vst [vmem:[#allocation2] sm:$0x3] %v83
    %v85 = vadd.f32 %v59, %v61
    %v86 = vadd.f32 %v60, %v62
    %v87 = vld [vmem:[#allocation3] sm:$0x3]
    %v88 = vmul.f32 %v85, %v85
    %v89 = vmul.f32 %v86, %v86
    %v90 = vrot.slane %v88, 4
    %v91 = vadd.f32 %v88, %v90
    %v92 = vrot.slane %v91, 2
    %v93 = vadd.f32 %v91, %v92
    %v94 = vrot.slane %v93, 1
    %v95 = vadd.f32 %v93, %v94
    %v96 = vrot.slane %v89, 4
    %v97 = vadd.f32 %v89, %v96
    %v98 = vrot.slane %v97, 2
    %v99 = vadd.f32 %v97, %v98
    %v100 = vrot.slane %v99, 1
    %v101 = vadd.f32 %v99, %v100
    %v104 = vsel %vm80, %v101, %v95
    %v106 = vadd.f32 %v87, %v104
    %107 = vst [vmem:[#allocation3] sm:$0x3] %v106
    %v108 = vmax.f32 %v59, 0.001
    %v109 = vmax.f32 %v60, 0.001
    %v110 = vmin.f32 %v108, 0.999
    %v111 = vmin.f32 %v109, 0.999
    %v112 = vsub.f32 1.0, %v110
    %v113 = vsub.f32 1.0, %v111
    %v114 = vmul.f32 %v112, %v112
    %v115 = vmul.f32 %v113, %v113
    %v116 = vmul.f32 %v61, %v114
    %v117 = vmul.f32 %v62, %v115
    %v118 = vlog2.pop %v110
    %v119 = vmul.f32 %v118, 0.6931472
    %v120 = vlog2.pop %v111
    %v121 = vmul.f32 %v120, 0.6931472
    %v122 = vmul.f32 %v116, %v119
    %v123 = vmul.f32 %v117, %v121
    %v124 = vsub.f32 1.0, %v61
    %v125 = vsub.f32 1.0, %v62
    %v126 = vmul.f32 %v110, %v110
    %v127 = vmul.f32 %v111, %v111
    %v128 = vmul.f32 %v124, %v126
    %v129 = vmul.f32 %v125, %v127
    %v130 = vlog2.pop %v112
    %v131 = vmul.f32 %v130, 0.6931472
    %v132 = vlog2.pop %v113
    %v133 = vmul.f32 %v132, 0.6931472
    %v134 = vmul.f32 %v128, %v131
    %v135 = vmul.f32 %v129, %v133
    %v136 = vadd.f32 %v122, %v134
    %v137 = vadd.f32 %v123, %v135
    %v138 = vld [vmem:[#allocation4] sm:$0x3]
    %v139 = vrot.slane %v136, 4
    %v140 = vadd.f32 %v136, %v139
    %v141 = vrot.slane %v140, 2
    %v142 = vadd.f32 %v140, %v141
    %v143 = vrot.slane %v142, 1
    %v144 = vadd.f32 %v142, %v143
    %v145 = vrot.slane %v137, 4
    %v146 = vadd.f32 %v137, %v145
    %v147 = vrot.slane %v146, 2
    %v148 = vadd.f32 %v146, %v147
    %v149 = vrot.slane %v148, 1
    %v150 = vadd.f32 %v148, %v149
    %v153 = vsel %vm80, %v150, %v144
    %v155 = vadd.f32 %v138, %v153
    %156 = vst [vmem:[#allocation4] sm:$0x3] %v155
    // Predicated region
    $region22: #{tpu_custom_call.1} parent=1 // pred_check
      %p157 = pneg %p52
    $region23: #{tpu_custom_call.1} parent=1 // pred_check_branch
      %159 = sbr.rel (%p157) target = $region25
    $region24: #{tpu_custom_call.1} parent=1 // pred_region
      %v160 = vld [vmem:[#allocation2] sm:$0x3]
      %161 = vst [vmem:[#allocation10] sm:$0x3] %v160
      %v162 = vld [vmem:[#allocation3] sm:$0x3]
      %163 = vst [vmem:[#allocation11] sm:$0x3] %v162
      %v164 = vld [vmem:[#allocation4] sm:$0x3]
      %165 = vst [vmem:[#allocation13] sm:$0x3] %v164
    $region25: #{tpu_custom_call.1} parent=1 // pred_fallthru
      _
    // Predicated region
    $region26: #{tpu_custom_call.1} parent=1 // pred_check
      _
    $region27: #{tpu_custom_call.1} parent=1 // pred_check_branch
      %167 = sbr.rel (0) target = $region29
    $region28: #{tpu_custom_call.1} parent=1 // pred_region
      %s169 = ssub.s32 32, 32
      %170 = vsyncadd [#allocation7], %s169
      %s172 = sshll.u32 [#allocation10], 4
      %s173 = int_to_ptr.vmem [resolvable:$true] %s172
      %175 = dma.vmem_to_hbm [thread:$0]  %s173, 32, %s2, [#allocation7]
    $region29: #{tpu_custom_call.1} parent=1 // pred_fallthru
      _
    // Predicated region
    $region30: #{tpu_custom_call.1} parent=1 // pred_check
      _
    $region31: #{tpu_custom_call.1} parent=1 // pred_check_branch
      %177 = sbr.rel (0) target = $region33
    $region32: #{tpu_custom_call.1} parent=1 // pred_region
      %s179 = ssub.s32 32, 32
      %180 = vsyncadd [#allocation12], %s179
      %s182 = sshll.u32 [#allocation11], 4
      %s183 = int_to_ptr.vmem [resolvable:$true] %s182
      %185 = dma.vmem_to_hbm [thread:$0]  %s183, 32, %s3, [#allocation12]
    $region33: #{tpu_custom_call.1} parent=1 // pred_fallthru
      _
    // Predicated region
    $region34: #{tpu_custom_call.1} parent=1 // pred_check
      _
    $region35: #{tpu_custom_call.1} parent=1 // pred_check_branch
      %187 = sbr.rel (0) target = $region37
    $region36: #{tpu_custom_call.1} parent=1 // pred_region
      %s189 = ssub.s32 32, 32
      %190 = vsyncadd [#allocation12], %s189
      %s192 = sshll.u32 [#allocation13], 4
      %s193 = int_to_ptr.vmem [resolvable:$true] %s192
      %195 = dma.vmem_to_hbm [thread:$0]  %s193, 32, %s4, [#allocation12]
    $region37: #{tpu_custom_call.1} parent=1 // pred_fallthru
      _
    // Predicated region
    $region38: #{tpu_custom_call.1} parent=1 // pred_check
      _
    $region39: #{tpu_custom_call.1} parent=1 // pred_check_branch
      %197 = sbr.rel (0) target = $region41
    $region40: #{tpu_custom_call.1} parent=1 // pred_region
      %198 = dma.done [#allocation7], 32
    $region41: #{tpu_custom_call.1} parent=1 // pred_fallthru
      _
    // Predicated region
    $region42: #{tpu_custom_call.1} parent=1 // pred_check
      _
    $region43: #{tpu_custom_call.1} parent=1 // pred_check_branch
      %200 = sbr.rel (0) target = $region45
    $region44: #{tpu_custom_call.1} parent=1 // pred_region
      %201 = dma.done [#allocation12], 32
    $region45: #{tpu_custom_call.1} parent=1 // pred_fallthru
      _
    // Predicated region
    $region46: #{tpu_custom_call.1} parent=1 // pred_check
      _
    $region47: #{tpu_custom_call.1} parent=1 // pred_check_branch
      %203 = sbr.rel (0) target = $region49
    $region48: #{tpu_custom_call.1} parent=1 // pred_region
      %204 = dma.done [#allocation12], 32
    $region49: #{tpu_custom_call.1} parent=1 // pred_fallthru
      _
    %205 = vsyncpa [#allocation6], 1
    %206 = vsyncpa [#allocation9], 1
    %207 = vsyncpa [#allocation7], 1
    %208 = vsyncpa [#allocation12], 1

</llo_original>
